<compile_context>
chip_gen: v7x
topology: tpu7x:2x2x1
jax: 0.10.0
libtpu: 0.0.40
codegen_flags: <defaults>
</compile_context>

<pallas_src>
import jax
import jax.numpy as jnp
from jax.experimental import pallas as pl
from jax.experimental.pallas import tpu as pltpu


def _downsample_kernel(wt_ref, patches_ref, scale_ref, shift_ref, o_ref):
    """Single invocation; the whole (tiny) problem lives in VMEM.

    wt_ref:      (Cout, K)   K = KH*KW*Cin; row = cout, col = (kh, kw, cin)
    patches_ref: (K, 4*M)    M = N*Hp2*Wp2; col = q*M + flat(n, i, j), q = 2x2 pool tap
    scale_ref:   (Cout, 1)   BN scale  = gamma / sqrt(var + eps)
    shift_ref:   (Cout, 1)   BN shift  = beta - mean*scale + scale*bias   (conv bias folded in)
    o_ref:       (Cout, M)   lane-dense output (transposed back to NCHW in the wrapper)
    """
    M = o_ref.shape[1]

    # Conv for all batches and all four pool taps in ONE MXU matmul.
    y = jnp.dot(wt_ref[...], patches_ref[...],
                preferred_element_type=jnp.float32)            # (Cout, 4*M)

    # 2x2 max-pool == max over four contiguous, lane-aligned column blocks (pure VPU).
    p = jnp.maximum(jnp.maximum(y[:, 0 * M:1 * M], y[:, 1 * M:2 * M]),
                    jnp.maximum(y[:, 2 * M:3 * M], y[:, 3 * M:4 * M]))   # (Cout, M)

    # BatchNorm affine (running stats, conv bias folded) + ReLU.  Dropout: identity in eval.
    scale = scale_ref[...]   # (Cout, 1) -> lane broadcast
    shift = shift_ref[...]
    o_ref[...] = jnp.maximum(p * scale + shift, 0.0).astype(o_ref.dtype)


def downsample_forward(x, w, b, gamma, beta, running_mean, running_var,
                       *, padding=1, stride=1, eps=1e-5):
    """x: (N, Cin, H, W) NCHW.  Returns (N, Cout, Hout//2, Wout//2) NCHW."""
    N, Cin, H, W = x.shape
    Cout, _, KH, KW = w.shape
    Hout = (H + 2 * padding - KH) // stride + 1
    Wout = (W + 2 * padding - KW) // stride + 1
    Hp2, Wp2 = Hout // 2, Wout // 2          # MaxPool2d(2) floors odd trailing row/col
    assert Hp2 >= 1 and Wp2 >= 1, "output too small for 2x2 max-pool"
    M = N * Hp2 * Wp2
    K = KH * KW * Cin

    # ---------- wrapper-side layout glue (plain XLA) ----------
    x_pad = jnp.pad(x, ((0, 0), (0, 0), (padding, padding), (padding, padding)))

    # im2col with the 2x2 pool taps split into 4 contiguous column blocks:
    #   column index = q*M + n*(Hp2*Wp2) + i*Wp2 + j,  q = dh*2 + dw
    #   row    index = (kh*KW + kw)*Cin + c
    q_blocks = []
    for dh in range(2):
        for dw in range(2):
            taps = []
            for kh in range(KH):
                for kw in range(KW):
                    h0 = stride * dh + kh
                    w0 = stride * dw + kw
                    sl = x_pad[:, :,
                               h0:h0 + 2 * stride * (Hp2 - 1) + 1:2 * stride,
                               w0:w0 + 2 * stride * (Wp2 - 1) + 1:2 * stride]
                    taps.append(sl)                      # (N, Cin, Hp2, Wp2)
            t = jnp.stack(taps, axis=0)                  # (KH*KW, N, Cin, Hp2, Wp2)
            t = jnp.transpose(t, (0, 2, 1, 3, 4))        # (KH*KW, Cin, N, Hp2, Wp2)
            q_blocks.append(t.reshape(K, M))
    patches = jnp.concatenate(q_blocks, axis=1)          # (K, 4*M)

    wt = jnp.transpose(w, (0, 2, 3, 1)).reshape(Cout, K)          # (Cout, K)
    scale = gamma / jnp.sqrt(running_var + eps)
    shift = beta - running_mean * scale + scale * b               # conv bias folded into shift
    scale2 = scale.reshape(Cout, 1).astype(jnp.float32)
    shift2 = shift.reshape(Cout, 1).astype(jnp.float32)

    out_flat = pl.pallas_call(
        _downsample_kernel,
        out_shape=jax.ShapeDtypeStruct((Cout, M), jnp.float32),
        in_specs=[pl.BlockSpec(memory_space=pltpu.MemorySpace.VMEM)] * 4,
        out_specs=pl.BlockSpec(memory_space=pltpu.MemorySpace.VMEM),
    )(wt, patches, scale2, shift2)

    # (Cout, M) -> (Cout, N, Hp2, Wp2) -> NCHW
    return jnp.transpose(out_flat.reshape(Cout, N, Hp2, Wp2), (1, 0, 2, 3))


def _reference(x, w, b, gamma, beta, running_mean, running_var, *, padding=1, stride=1, eps=1e-5):
    conv = jax.lax.conv_general_dilated(
        x, w, window_strides=(stride, stride),
        padding=((padding, padding), (padding, padding)),
        dimension_numbers=("NCHW", "OIHW", "NCHW")) + b[None, :, None, None]
    pool = jax.lax.reduce_window(conv, -jnp.inf, jax.lax.max,
                                 (1, 1, 2, 2), (1, 1, 2, 2), "VALID")
    scale = gamma / jnp.sqrt(running_var + eps)
    shift = beta - running_mean * scale
    return jnp.maximum(pool * scale[None, :, None, None] + shift[None, :, None, None], 0.0)


if __name__ == "__main__":
    # Module config: DownsampleLayer(in_channels=4, out_channels=8, kernel_size=3,
    #                                padding=1, stride=1)
    N, Cin, H, W = 2, 4, 16, 16
    Cout, KH, KW = 8, 3, 3

    key = jax.random.PRNGKey(0)
    kx, kw, kb, kg, kbeta = jax.random.split(key, 5)

    x = jax.random.normal(kx, (N, Cin, H, W), dtype=jnp.float32)
    w = jax.random.normal(kw, (Cout, Cin, KH, KW), dtype=jnp.float32) * 0.1
    b = jax.random.normal(kb, (Cout,), dtype=jnp.float32) * 0.1
    # BatchNorm parameters (nontrivial affine; PyTorch-default running stats).
    gamma = 1.0 + 0.1 * jax.random.normal(kg, (Cout,), dtype=jnp.float32)
    beta = 0.1 * jax.random.normal(kbeta, (Cout,), dtype=jnp.float32)
    running_mean = jnp.zeros((Cout,), dtype=jnp.float32)
    running_var = jnp.ones((Cout,), dtype=jnp.float32)

    out = downsample_forward(x, w, b, gamma, beta, running_mean, running_var,
                             padding=1, stride=1)
    out = jax.block_until_ready(out)

    ref = _reference(x, w, b, gamma, beta, running_mean, running_var, padding=1, stride=1)
    assert out.shape == (N, Cout, H // 2, W // 2), out.shape
    assert jnp.allclose(out, ref, atol=1e-4, rtol=1e-4), float(jnp.max(jnp.abs(out - ref)))

    print("KERNEL_OK")
</pallas_src>

<mosaic_0001>
module attributes {stable_mosaic.version = 11 : i64} {
  func.func @_downsample_kernel(%arg0: memref<8x36xf32, #tpu.memory_space<vmem>>, %arg1: memref<36x512xf32, #tpu.memory_space<vmem>>, %arg2: memref<8x1xf32, #tpu.memory_space<vmem>>, %arg3: memref<8x1xf32, #tpu.memory_space<vmem>>, %arg4: memref<8x128xf32, #tpu.memory_space<vmem>>) attributes {dimension_semantics = [], scalar_prefetch = 0 : i64, scratch_operands = 0 : i64, tpu.core_type = #tpu.core_type<tc>} {
    %c0 = arith.constant 0 : index
    %c0_0 = arith.constant 0 : index
    %0 = vector.load %arg0[%c0, %c0_0] : memref<8x36xf32, #tpu.memory_space<vmem>>, vector<8x36xf32>
    %c0_1 = arith.constant 0 : index
    %c0_2 = arith.constant 0 : index
    %1 = vector.load %arg1[%c0_1, %c0_2] : memref<36x512xf32, #tpu.memory_space<vmem>>, vector<36x512xf32>
    %cst = arith.constant dense<0.000000e+00> : vector<8x512xf32>
    %2 = tpu.matmul %0, %1, %cst {dimension_numbers = #tpu.dot_dimension_numbers<[1], [0], [0], [1], [0, 0, 1, 1], [], []>} : vector<8x36xf32>, vector<36x512xf32>, vector<8x512xf32> -> vector<8x512xf32>
    %3 = vector.extract_strided_slice %2 {offsets = [0, 0], sizes = [8, 128], strides = [1, 1]} : vector<8x512xf32> to vector<8x128xf32>
    %4 = vector.extract_strided_slice %2 {offsets = [0, 128], sizes = [8, 128], strides = [1, 1]} : vector<8x512xf32> to vector<8x128xf32>
    %5 = arith.maximumf %3, %4 : vector<8x128xf32>
    %6 = vector.extract_strided_slice %2 {offsets = [0, 256], sizes = [8, 128], strides = [1, 1]} : vector<8x512xf32> to vector<8x128xf32>
    %7 = vector.extract_strided_slice %2 {offsets = [0, 384], sizes = [8, 128], strides = [1, 1]} : vector<8x512xf32> to vector<8x128xf32>
    %8 = arith.maximumf %6, %7 : vector<8x128xf32>
    %9 = arith.maximumf %5, %8 : vector<8x128xf32>
    %c0_3 = arith.constant 0 : index
    %c0_4 = arith.constant 0 : index
    %10 = vector.load %arg2[%c0_3, %c0_4] : memref<8x1xf32, #tpu.memory_space<vmem>>, vector<8x1xf32>
    %c0_5 = arith.constant 0 : index
    %c0_6 = arith.constant 0 : index
    %11 = vector.load %arg3[%c0_5, %c0_6] : memref<8x1xf32, #tpu.memory_space<vmem>>, vector<8x1xf32>
    %12 = vector.broadcast %10 : vector<8x1xf32> to vector<8x128xf32>
    %13 = arith.mulf %9, %12 : vector<8x128xf32>
    %14 = vector.broadcast %11 : vector<8x1xf32> to vector<8x128xf32>
    %15 = arith.addf %13, %14 : vector<8x128xf32>
    %cst_7 = arith.constant 0.000000e+00 : f32
    %16 = vector.broadcast %cst_7 : f32 to vector<8x128xf32>
    %17 = arith.maximumf %15, %16 : vector<8x128xf32>
    %c0_8 = arith.constant 0 : index
    %c0_9 = arith.constant 0 : index
    %18 = vector.load %arg4[%c0_8, %c0_9] : memref<8x128xf32, #tpu.memory_space<vmem>>, vector<8x128xf32>
    tpu.vector_store %arg4[%c0_8, %c0_9], %17 {strides = array<i32>} : memref<8x128xf32, #tpu.memory_space<vmem>>, vector<8x128xf32>,
    return
  }
}

</mosaic_0001>

<llo_original>
// kernel: tpu_custom_call.1
$region0: #{tpu_custom_call.1}
  #allocation0 [shape = 'u32[]', space=smem, size = 0x4, offset = 0x4, fixed_abs, tag = 'smem constant byte address 0x4 - core index']
  #allocation1 [shape = 'u32[144,128]{1,0:T(1,128)}', space=vmem, size = 0x12000, scoped, tag = 'internal scratch']
  %s0 = inlined_call_operand.vmem [shape: f32[8,36], index: 0, kind: input, shape index: {}]
  %s1 = inlined_call_operand.hbm [shape: f32[36,512], index: 1, kind: input, shape index: {}]
  %s2 = inlined_call_operand.vmem [shape: f32[8,1], index: 2, kind: input, shape index: {}]
  %s3 = inlined_call_operand.vmem [shape: f32[8,1], index: 3, kind: input, shape index: {}]
  %s4 = inlined_call_operand.hbm [shape: f32[8,128], index: 4, kind: output, shape index: {}]
  %s5 = sld [smem:[#allocation0]]
  $region30: #{tpu_custom_call.1} parent=0
    _
  %s7 = ssub.s32 1, %s5
  %s8 = scalar_select 0, %s7, %s5
  $region1: #{tpu_custom_call.1} parent=0
    #allocation2 [shape = 'u8[81920]{0}', space=vmem, size = 0x14000, scoped, tag = 'input window, operand 1, single buffered']
    #allocation3 [shape = 's32[1]{0}', space=sflag, size = 0x4, scoped, tag = 'scoped memory for tpu_custom_call.1']
    #allocation4 [shape = 's32[1]{0}', space=sflag, size = 0x4, scoped, tag = 'scoped memory for tpu_custom_call.1']
    #allocation5 [shape = 'u8[4096]{0}', space=vmem, size = 0x1000, scoped, tag = 'output window, operand 0, single buffered']
    %9 = vsyncpa [#allocation3], 0
    %10 = vsyncpa [#allocation4], 0
    // Predicated region
    $region2: #{tpu_custom_call.1} parent=1 // pred_check
      _
    $region3: #{tpu_custom_call.1} parent=1 // pred_check_branch
      %12 = sbr.rel (0) target = $region5
    $region4: #{tpu_custom_call.1} parent=1 // pred_region
      _
    $region5: #{tpu_custom_call.1} parent=1 // pred_fallthru
      _
    // Predicated region
    $region6: #{tpu_custom_call.1} parent=1 // pred_check
      _
    $region7: #{tpu_custom_call.1} parent=1 // pred_check_branch
      %14 = sbr.rel (0) target = $region9
    $region8: #{tpu_custom_call.1} parent=1 // pred_region
      %s16 = ssub.s32 2560, 2560
      %17 = vsyncadd [#allocation3], %s16
      %s18 = sshll.u32 [#allocation2], 4
      %s19 = int_to_ptr.vmem [resolvable:$true] %s18
      %24 = dma.hbm_to_vmem [thread:$0]  %s1, 2560, %s19, [#allocation3], 512, 512, 32
    $region9: #{tpu_custom_call.1} parent=1 // pred_fallthru
      _
    // Predicated region
    $region10: #{tpu_custom_call.1} parent=1 // pred_check
      _
    $region11: #{tpu_custom_call.1} parent=1 // pred_check_branch
      %26 = sbr.rel (0) target = $region13
    $region12: #{tpu_custom_call.1} parent=1 // pred_region
      _
    $region13: #{tpu_custom_call.1} parent=1 // pred_fallthru
      _
    // Predicated region
    $region14: #{tpu_custom_call.1} parent=1 // pred_check
      _
    $region15: #{tpu_custom_call.1} parent=1 // pred_check_branch
      %28 = sbr.rel (0) target = $region17
    $region16: #{tpu_custom_call.1} parent=1 // pred_region
      _
    $region17: #{tpu_custom_call.1} parent=1 // pred_fallthru
      _
    // Predicated region
    $region18: #{tpu_custom_call.1} parent=1 // pred_check
      _
    $region19: #{tpu_custom_call.1} parent=1 // pred_check_branch
      %30 = sbr.rel (0) target = $region21
    $region20: #{tpu_custom_call.1} parent=1 // pred_region
      %31 = dma.done [#allocation3], 2560
    $region21: #{tpu_custom_call.1} parent=1 // pred_fallthru
      _
    %v32 = vld [vmem:[%s0] sm:$0xff]
    %v33 = vld [vmem:[#allocation2] sm:$0xff]
    %v34 = vld [vmem:[#allocation2 + $0x8] sm:$0xff]
    %v35 = vld [vmem:[#allocation2 + $0x10] sm:$0xff]
    %v36 = vld [vmem:[#allocation2 + $0x18] sm:$0xff]
    %v37 = vld [vmem:[#allocation2 + $0x20] sm:$0xff]
    %v38 = vld [vmem:[#allocation2 + $0x28] sm:$0xff]
    %v39 = vld [vmem:[#allocation2 + $0x30] sm:$0xff]
    %v40 = vld [vmem:[#allocation2 + $0x38] sm:$0xff]
    %v41 = vld [vmem:[#allocation2 + $0x40] sm:$0xff]
    %v42 = vld [vmem:[#allocation2 + $0x48] sm:$0xff]
    %v43 = vld [vmem:[#allocation2 + $0x50] sm:$0xff]
    %v44 = vld [vmem:[#allocation2 + $0x58] sm:$0xff]
    %v45 = vld [vmem:[#allocation2 + $0x60] sm:$0xff]
    %v46 = vld [vmem:[#allocation2 + $0x68] sm:$0xff]
    %v47 = vld [vmem:[#allocation2 + $0x70] sm:$0xff]
    %v48 = vld [vmem:[#allocation2 + $0x78] sm:$0xff]
    %v49 = vld [vmem:[#allocation2 + $0x80] sm:$0xf]
    %v50 = vld [vmem:[#allocation2 + $0x88] sm:$0xf]
    %v51 = vld [vmem:[#allocation2 + $0x90] sm:$0xf]
    %v52 = vld [vmem:[#allocation2 + $0x98] sm:$0xf]
    %vm53 = vcmask 293888
    %v55 = vsel %vm53, %v32, 0
    %vm57 = vcmask 1043456
    %v59 = vsel %vm57, %v49, 0
    %v62 = vsel %vm57, %v50, 0
    %v65 = vsel %vm57, %v51, 0
    %v68 = vsel %vm57, %v52, 0
    %70 = vmatprep.subr.mxu0 %v34
    %71 = vmatpush1.msra.mxu0 %v33
    %72 = vmatprep.subr.mxu0 %v38
    %73 = vmatpush1.msra.mxu0 %v37
    %74 = vmatprep.subr.mxu0 %v42
    %75 = vmatpush1.msra.mxu0 %v41
    %76 = vmatprep.subr.mxu0 %v46
    %77 = vmatpush1.msra.mxu0 %v45
    %78 = vmatprep.subr.mxu0 %v62
    %79 = vmatpush1.msra.mxu0 %v59
    %80 = vmatprep.subr.mxu0 0.0
    %81 = vmatpush1.msra.mxu0 0.0
    %82 = vmatprep.subr.mxu0 0.0
    %83 = vmatpush1.msra.mxu0 0.0
    %84 = vmatprep.subr.mxu0 0.0
    %85 = vmatpush1.msra.mxu0 0.0
    %86 = vmatprep.subr.mxu0 0.0
    %87 = vmatpush1.msra.mxu0 0.0
    %88 = vmatprep.subr.mxu0 0.0
    %89 = vmatpush1.msra.mxu0 0.0
    %90 = vmatprep.subr.mxu0 0.0
    %91 = vmatpush1.msra.mxu0 0.0
    %92 = vmatprep.subr.mxu0 0.0
    %93 = vmatpush1.msra.mxu0 0.0
    %94 = vmatprep.subr.mxu0 0.0
    %95 = vmatpush1.msra.mxu0 0.0
    %96 = vmatprep.subr.mxu0 0.0
    %97 = vmatpush1.msra.mxu0 0.0
    %98 = vmatprep.subr.mxu0 0.0
    %99 = vmatpush1.msra.mxu0 0.0
    %100 = vmatprep.subr.mxu0 0.0
    %101 = vmatpush1.msra.mxu0 0.0
    %102 = vmatprep.subr.mxu0 0.0
    %103 = vmatpush1.msra.mxu0 0.0
    %104 = vmatprep.subr.mxu0 0.0
    %105 = vmatpush1.msra.mxu0 0.0
    %106 = vmatprep.subr.mxu0 0.0
    %107 = vmatpush1.msra.mxu0 0.0
    %108 = vmatprep.subr.mxu0 0.0
    %109 = vmatpush1.msra.mxu0 0.0
    %110 = vmatprep.subr.mxu0 0.0
    %111 = vmatpush1.msra.mxu0 0.0
    %112 = vmatprep.subr.mxu0 0.0
    %113 = vmatpush1.msra.mxu0 0.0
    %114 = vmatprep.subr.mxu0 0.0
    %115 = vmatpush1.msra.mxu0 0.0
    %116 = vmatprep.subr.mxu0 0.0
    %117 = vmatpush1.msra.mxu0 0.0
    %118 = vmatprep.subr.mxu0 0.0
    %119 = vmatpush1.msra.mxu0 0.0
    %120 = vmatprep.subr.mxu0 0.0
    %121 = vmatpush1.msra.mxu0 0.0
    %122 = vmatprep.subr.mxu0 0.0
    %123 = vmatpush1.msra.mxu0 0.0
    %124 = vmatprep.subr.mxu0 0.0
    %125 = vmatpush1.msra.mxu0 0.0
    %126 = vmatprep.subr.mxu0 0.0
    %127 = vmatpush1.msra.mxu0 0.0
    %128 = vmatprep.subr.mxu0 0.0
    %129 = vmatpush1.msra.mxu0 0.0
    %130 = vmatprep.subr.mxu0 0.0
    %131 = vmatpush1.msra.mxu0 0.0
    %132 = vmatprep.subr.mxu0 0.0
    %133 = vmatpush1.msra.mxu0 0.0
    %134 = vmatprep.mubr.f32.mxu0 0.0
    %135 = vmatmul.mubr.f32.gmra.mrb[0].mxu0 %v55
    %v136 = vpop.f32.mrb[0].mxu0
    %v137 = vadd.f32 0.0, %v136
    %v138 = vpop.f32.mrb[0].mxu0
    %v139 = vadd.f32 0.0, %v138
    %140 = vdwg.mxu0
    %141 = vmatprep.subr.mxu0 %v36
    %142 = vmatpush1.msra.mxu0 %v35
    %143 = vmatprep.subr.mxu0 %v40
    %144 = vmatpush1.msra.mxu0 %v39
    %145 = vmatprep.subr.mxu0 %v44
    %146 = vmatpush1.msra.mxu0 %v43
    %147 = vmatprep.subr.mxu0 %v48
    %148 = vmatpush1.msra.mxu0 %v47
    %149 = vmatprep.subr.mxu0 %v68
    %150 = vmatpush1.msra.mxu0 %v65
    %151 = vmatprep.subr.mxu0 0.0
    %152 = vmatpush1.msra.mxu0 0.0
    %153 = vmatprep.subr.mxu0 0.0
    %154 = vmatpush1.msra.mxu0 0.0
    %155 = vmatprep.subr.mxu0 0.0
    %156 = vmatpush1.msra.mxu0 0.0
    %157 = vmatprep.subr.mxu0 0.0
    %158 = vmatpush1.msra.mxu0 0.0
    %159 = vmatprep.subr.mxu0 0.0
    %160 = vmatpush1.msra.mxu0 0.0
    %161 = vmatprep.subr.mxu0 0.0
    %162 = vmatpush1.msra.mxu0 0.0
    %163 = vmatprep.subr.mxu0 0.0
    %164 = vmatpush1.msra.mxu0 0.0
    %165 = vmatprep.subr.mxu0 0.0
    %166 = vmatpush1.msra.mxu0 0.0
    %167 = vmatprep.subr.mxu0 0.0
    %168 = vmatpush1.msra.mxu0 0.0
    %169 = vmatprep.subr.mxu0 0.0
    %170 = vmatpush1.msra.mxu0 0.0
    %171 = vmatprep.subr.mxu0 0.0
    %172 = vmatpush1.msra.mxu0 0.0
    %173 = vmatprep.subr.mxu0 0.0
    %174 = vmatpush1.msra.mxu0 0.0
    %175 = vmatprep.subr.mxu0 0.0
    %176 = vmatpush1.msra.mxu0 0.0
    %177 = vmatprep.subr.mxu0 0.0
    %178 = vmatpush1.msra.mxu0 0.0
    %179 = vmatprep.subr.mxu0 0.0
    %180 = vmatpush1.msra.mxu0 0.0
    %181 = vmatprep.subr.mxu0 0.0
    %182 = vmatpush1.msra.mxu0 0.0
    %183 = vmatprep.subr.mxu0 0.0
    %184 = vmatpush1.msra.mxu0 0.0
    %185 = vmatprep.subr.mxu0 0.0
    %186 = vmatpush1.msra.mxu0 0.0
    %187 = vmatprep.subr.mxu0 0.0
    %188 = vmatpush1.msra.mxu0 0.0
    %189 = vmatprep.subr.mxu0 0.0
    %190 = vmatpush1.msra.mxu0 0.0
    %191 = vmatprep.subr.mxu0 0.0
    %192 = vmatpush1.msra.mxu0 0.0
    %193 = vmatprep.subr.mxu0 0.0
    %194 = vmatpush1.msra.mxu0 0.0
    %195 = vmatprep.subr.mxu0 0.0
    %196 = vmatpush1.msra.mxu0 0.0
    %197 = vmatprep.subr.mxu0 0.0
    %198 = vmatpush1.msra.mxu0 0.0
    %199 = vmatprep.subr.mxu0 0.0
    %200 = vmatpush1.msra.mxu0 0.0
    %201 = vmatprep.subr.mxu0 0.0
    %202 = vmatpush1.msra.mxu0 0.0
    %203 = vmatprep.subr.mxu0 0.0
    %204 = vmatpush1.msra.mxu0 0.0
    %205 = vmatprep.mubr.f32.mxu0 0.0
    %206 = vmatmul.mubr.f32.gmra.mrb[0].mxu0 %v55
    %v207 = vpop.f32.mrb[0].mxu0
    %v208 = vadd.f32 0.0, %v207
    %v209 = vpop.f32.mrb[0].mxu0
    %v210 = vadd.f32 0.0, %v209
    %211 = vdwg.mxu0
    %v212 = vmax.f32 %v137, %v139
    %v213 = vmax.f32 %v208, %v210
    %v214 = vmax.f32 %v212, %v213
    %v215 = vld [vmem:[%s2] sm:$0xff]
    %v216 = vld [vmem:[%s3] sm:$0xff]
    %218 = vset.pattern.permute.xlu0 0
    %219 = vperm.xlu0 %218, %v215
    %v220 = vpop.permute.xlu0 %219
    %v222 = vmul.f32 %v214, %v220
    %224 = vset.pattern.permute.xlu0 0
    %225 = vperm.xlu0 %224, %v216
    %v226 = vpop.permute.xlu0 %225
    %v228 = vadd.f32 %v222, %v226
    %v229 = vmax.f32 %v228, 0.0
    %230 = vst [vmem:[#allocation5] sm:$0xff] %v229
    // Predicated region
    $region22: #{tpu_custom_call.1} parent=1 // pred_check
      _
    $region23: #{tpu_custom_call.1} parent=1 // pred_check_branch
      %232 = sbr.rel (0) target = $region25
    $region24: #{tpu_custom_call.1} parent=1 // pred_region
      %s234 = ssub.s32 128, 128
      %235 = vsyncadd [#allocation4], %s234
      %s237 = sshll.u32 [#allocation5], 4
      %s238 = int_to_ptr.vmem [resolvable:$true] %s237
      %240 = dma.vmem_to_hbm [thread:$0]  %s238, 128, %s4, [#allocation4]
    $region25: #{tpu_custom_call.1} parent=1 // pred_fallthru
      _
    // Predicated region
    $region26: #{tpu_custom_call.1} parent=1 // pred_check
      _
    $region27: #{tpu_custom_call.1} parent=1 // pred_check_branch
      %242 = sbr.rel (0) target = $region29
    $region28: #{tpu_custom_call.1} parent=1 // pred_region
      %243 = dma.done [#allocation4], 128
    $region29: #{tpu_custom_call.1} parent=1 // pred_fallthru
      _
    %244 = vsyncpa [#allocation3], 1
    %245 = vsyncpa [#allocation4], 1

</llo_original>
